<compile_context>
chip_gen: v6e
topology: v6e:2x2x1
jax: 0.10.0
libtpu: 0.0.40
codegen_flags: <defaults>
</compile_context>

<pallas_src>
import jax
import jax.numpy as jnp
from jax.experimental import pallas as pl
from jax.experimental.pallas import tpu as pltpu


# ---------------------------------------------------------------------------
# Kernels: tiles are (TR, C) with C on the lanes; scale/bias are (1, C) rows.
# ---------------------------------------------------------------------------
def _bn_res_hardtanh_kernel(x_ref, r_ref, s_ref, b_ref, o_ref):
    x = x_ref[...].astype(jnp.float32)
    r = r_ref[...].astype(jnp.float32)
    y = x * s_ref[...] + b_ref[...] + r
    o_ref[...] = jnp.clip(y, -1.0, 1.0).astype(o_ref.dtype)


def _bn_hardtanh_kernel(x_ref, s_ref, b_ref, o_ref):
    x = x_ref[...].astype(jnp.float32)
    y = x * s_ref[...] + b_ref[...]
    o_ref[...] = jnp.clip(y, -1.0, 1.0).astype(o_ref.dtype)


# ---------------------------------------------------------------------------
# Tiling helpers
# ---------------------------------------------------------------------------
def _pick_row_tile(R, C, itemsize, target_block_bytes, min_grid=4):
    """Row-tile for a (R, C) channel-last view.

    Largest multiple of the sublane packing that (a) keeps one x tile near the
    byte budget and (b) leaves at least `min_grid` grid steps when R allows,
    so both v7x TensorCores get work and DMA/compute overlap is possible."""
    sublane = max(8, 32 // itemsize)          # 8 for f32, 16 for bf16, 32 for int8
    if R <= sublane:
        return R                               # full-extent block: always legal
    row_bytes = max(1, C * itemsize)
    tr = max(sublane, (target_block_bytes // row_bytes) // sublane * sublane)
    steps = max(1, min(min_grid, R // sublane))
    cap = -(-(-(-R // steps)) // sublane) * sublane   # ceil(ceil(R/steps)/sublane)*sublane
    tr = min(tr, cap)
    if tr >= R:
        return R                               # single full-extent block
    return int(tr)


# ---------------------------------------------------------------------------
# Channel-last fused epilogue (the Pallas entry point)
# ---------------------------------------------------------------------------
def fused_bn_residual_hardtanh(conv_out, scale, bias, residual=None, *,
                               target_block_bytes=4 << 20):
    """out = clip(conv_out * scale + bias (+ residual), -1, 1), channel-last.

    conv_out / residual: (N, H, W, C) activations (C on the 128 lanes).
    scale, bias: (C,) folded BatchNorm inference affine.
    residual=None covers the stem conv1->bn1->hardtanh path (no skip)."""
    N, H, W, C = conv_out.shape
    R = N * H * W
    x2 = conv_out.reshape(R, C)
    s2 = scale.reshape(1, C).astype(jnp.float32)
    b2 = bias.reshape(1, C).astype(jnp.float32)

    itemsize = jnp.dtype(conv_out.dtype).itemsize
    n_streams = 3 if residual is not None else 2          # x (+res) + out
    tr = _pick_row_tile(R, C, itemsize, target_block_bytes)
    grid = (pl.cdiv(R, tr),)

    x_spec = pl.BlockSpec((tr, C), lambda r: (r, 0))       # lane-dense tiles
    p_spec = pl.BlockSpec((1, C), lambda r: (0, 0))        # constant block -> DMA'd once

    # vmem limit derived from the actual double-buffered working set + slack.
    tile_bytes = tr * C * itemsize
    param_bytes = 2 * C * 4
    vmem_limit = 2 * n_streams * tile_bytes + 4 * param_bytes + (1 << 20)
    vmem_limit = int(min(max(vmem_limit, 16 << 20), 64 << 20))

    cp = pltpu.CompilerParams(
        dimension_semantics=("parallel",),
        vmem_limit_bytes=vmem_limit,
    )

    if residual is not None:
        r2 = residual.reshape(R, C)
        out2 = pl.pallas_call(
            _bn_res_hardtanh_kernel,
            out_shape=jax.ShapeDtypeStruct((R, C), conv_out.dtype),
            grid=grid,
            in_specs=[x_spec, x_spec, p_spec, p_spec],
            out_specs=x_spec,
            compiler_params=cp,
        )(x2, r2, s2, b2)
    else:
        out2 = pl.pallas_call(
            _bn_hardtanh_kernel,
            out_shape=jax.ShapeDtypeStruct((R, C), conv_out.dtype),
            grid=grid,
            in_specs=[x_spec, p_spec, p_spec],
            out_specs=x_spec,
            compiler_params=cp,
        )(x2, s2, b2)

    return out2.reshape(N, H, W, C)


# ---------------------------------------------------------------------------
# Convenience wrappers matching the PyTorch module's NCHW semantics
# ---------------------------------------------------------------------------
def _fold_bn(gamma, beta, running_mean, running_var, eps):
    scale = gamma / jnp.sqrt(running_var + eps)
    bias = beta - running_mean * scale
    return scale, bias


def downblock_epilogue_nchw(x, conv_out, gamma, beta, running_mean, running_var,
                            eps=1e-5):
    """DownBlock.forward (inference) after the binarized conv:
         residual1 = x[:, :planes];  out = hardtanh(bn(conv_out) + residual1)
    x: (N, 2*planes, H, W) block input; conv_out: (N, planes, H, W).
    NCHW in/out to match the PyTorch module; internally channel-last.
    (In a real pipeline keep activations NHWC so these transposes vanish.)"""
    planes = conv_out.shape[1]
    residual1 = x[:, :planes]
    scale, bias = _fold_bn(gamma, beta, running_mean, running_var, eps)
    co = jnp.transpose(conv_out, (0, 2, 3, 1))
    res = jnp.transpose(residual1, (0, 2, 3, 1))
    out = fused_bn_residual_hardtanh(co, scale, bias, res)
    return jnp.transpose(out, (0, 3, 1, 2))


def stem_bn_hardtanh_nchw(conv_out, gamma, beta, running_mean, running_var,
                          eps=1e-5):
    """ResNet stem: out = hardtanh(bn1(conv1(x))) given the conv1 output."""
    scale, bias = _fold_bn(gamma, beta, running_mean, running_var, eps)
    co = jnp.transpose(conv_out, (0, 2, 3, 1))
    out = fused_bn_residual_hardtanh(co, scale, bias, None)
    return jnp.transpose(out, (0, 3, 1, 2))


# ---------------------------------------------------------------------------
# Self-test
# ---------------------------------------------------------------------------
if __name__ == "__main__":
    key = jax.random.PRNGKey(0)
    eps = 1e-5

    # --- case 1: DownBlock epilogue (residual path), 7x7 spatial like layer4 ---
    N, planes, Hs, Ws = 2, 128, 7, 7
    k1, k2, k3, k4, k5, k6, k7 = jax.random.split(key, 7)
    x = jax.random.normal(k1, (N, 2 * planes, Hs, Ws), dtype=jnp.float32)
    conv_out = jax.random.normal(k2, (N, planes, Hs, Ws), dtype=jnp.float32)
    gamma = 1.0 + 0.1 * jax.random.normal(k3, (planes,), dtype=jnp.float32)
    beta = 0.1 * jax.random.normal(k4, (planes,), dtype=jnp.float32)
    mean = 0.1 * jax.random.normal(k5, (planes,), dtype=jnp.float32)
    var = 0.5 + jax.random.uniform(k6, (planes,), dtype=jnp.float32)

    out = jax.block_until_ready(
        downblock_epilogue_nchw(x, conv_out, gamma, beta, mean, var, eps))

    scale = gamma / jnp.sqrt(var + eps)
    bias = beta - mean * scale
    ref = jnp.clip(conv_out * scale[None, :, None, None]
                   + bias[None, :, None, None] + x[:, :planes], -1.0, 1.0)
    assert out.shape == conv_out.shape and out.dtype == conv_out.dtype
    assert jnp.allclose(out, ref, atol=1e-5, rtol=1e-5)

    # --- case 2: stem bn1 + hardtanh (no residual), bf16 activations, C = 64 ---
    Ns, Cs, Hst, Wst = 2, 64, 8, 8
    ka, kb, kc, kd, ke, kf = jax.random.split(k7, 6)
    conv1_out = jax.random.normal(ka, (Ns, Cs, Hst, Wst), dtype=jnp.float32)
    conv1_bf16 = conv1_out.astype(jnp.bfloat16)
    g1 = 1.0 + 0.1 * jax.random.normal(kb, (Cs,), dtype=jnp.float32)
    b1 = 0.1 * jax.random.normal(kc, (Cs,), dtype=jnp.float32)
    m1 = 0.1 * jax.random.normal(kd, (Cs,), dtype=jnp.float32)
    v1 = 0.5 + jax.random.uniform(ke, (Cs,), dtype=jnp.float32)

    out2 = jax.block_until_ready(
        stem_bn_hardtanh_nchw(conv1_bf16, g1, b1, m1, v1, eps))

    s1 = g1 / jnp.sqrt(v1 + eps)
    bi1 = b1 - m1 * s1
    ref2 = jnp.clip(conv1_bf16.astype(jnp.float32) * s1[None, :, None, None]
                    + bi1[None, :, None, None], -1.0, 1.0)
    assert out2.shape == conv1_bf16.shape and out2.dtype == jnp.bfloat16
    assert jnp.allclose(out2.astype(jnp.float32), ref2, atol=2e-2, rtol=2e-2)

    print("KERNEL_OK")
</pallas_src>

<mosaic_0001>
module attributes {stable_mosaic.version = 11 : i64} {
  func.func @_bn_res_hardtanh_kernel(%arg0: i32, %arg1: memref<32x128xf32, #tpu.memory_space<vmem>>, %arg2: memref<32x128xf32, #tpu.memory_space<vmem>>, %arg3: memref<1x128xf32, #tpu.memory_space<vmem>>, %arg4: memref<1x128xf32, #tpu.memory_space<vmem>>, %arg5: memref<32x128xf32, #tpu.memory_space<vmem>>) attributes {dimension_semantics = [#tpu.dimension_semantics<parallel>], iteration_bounds = array<i64: 4>, scalar_prefetch = 0 : i64, scratch_operands = 0 : i64, tpu.core_type = #tpu.core_type<tc>, window_params = [{transform_indices = @transform_0, window_bounds = array<i64: 32, 128>}, {transform_indices = @transform_1, window_bounds = array<i64: 32, 128>}, {pipeline_mode = #tpu.pipeline_mode<synchronous>, transform_indices = @transform_2, window_bounds = array<i64: 1, 128>}, {pipeline_mode = #tpu.pipeline_mode<synchronous>, transform_indices = @transform_3, window_bounds = array<i64: 1, 128>}, {transform_indices = @transform_4, window_bounds = array<i64: 32, 128>}]} {
    %c0 = arith.constant 0 : index
    %c0_0 = arith.constant 0 : index
    %0 = vector.load %arg1[%c0, %c0_0] : memref<32x128xf32, #tpu.memory_space<vmem>>, vector<32x128xf32>
    %c0_1 = arith.constant 0 : index
    %c0_2 = arith.constant 0 : index
    %1 = vector.load %arg2[%c0_1, %c0_2] : memref<32x128xf32, #tpu.memory_space<vmem>>, vector<32x128xf32>
    %c0_3 = arith.constant 0 : index
    %c0_4 = arith.constant 0 : index
    %2 = vector.load %arg3[%c0_3, %c0_4] : memref<1x128xf32, #tpu.memory_space<vmem>>, vector<1x128xf32>
    %3 = vector.broadcast %2 : vector<1x128xf32> to vector<32x128xf32>
    %4 = arith.mulf %0, %3 : vector<32x128xf32>
    %c0_5 = arith.constant 0 : index
    %c0_6 = arith.constant 0 : index
    %5 = vector.load %arg4[%c0_5, %c0_6] : memref<1x128xf32, #tpu.memory_space<vmem>>, vector<1x128xf32>
    %6 = vector.broadcast %5 : vector<1x128xf32> to vector<32x128xf32>
    %7 = arith.addf %4, %6 : vector<32x128xf32>
    %8 = arith.addf %7, %1 : vector<32x128xf32>
    %cst = arith.constant -1.000000e+00 : f32
    %cst_7 = arith.constant 1.000000e+00 : f32
    %9 = vector.broadcast %cst : f32 to vector<32x128xf32>
    %10 = arith.maximumf %9, %8 : vector<32x128xf32>
    %11 = vector.broadcast %cst_7 : f32 to vector<32x128xf32>
    %12 = arith.minimumf %11, %10 : vector<32x128xf32>
    %c0_8 = arith.constant 0 : index
    %c0_9 = arith.constant 0 : index
    %13 = vector.load %arg5[%c0_8, %c0_9] : memref<32x128xf32, #tpu.memory_space<vmem>>, vector<32x128xf32>
    tpu.vector_store %arg5[%c0_8, %c0_9], %12 {strides = array<i32>} : memref<32x128xf32, #tpu.memory_space<vmem>>, vector<32x128xf32>,
    return
  }
  func.func @transform_0(%arg0: i32) -> (i32, i32) {
    %c0_i32 = arith.constant 0 : i32
    %c0_i32_0 = arith.constant 0 : i32
    return %arg0, %c0_i32 : i32, i32
  }
  func.func @transform_1(%arg0: i32) -> (i32, i32) {
    %c0_i32 = arith.constant 0 : i32
    %c0_i32_0 = arith.constant 0 : i32
    return %arg0, %c0_i32 : i32, i32
  }
  func.func @transform_2(%arg0: i32) -> (i32, i32) {
    %c0_i32 = arith.constant 0 : i32
    %c0_i32_0 = arith.constant 0 : i32
    %c0_i32_1 = arith.constant 0 : i32
    return %c0_i32, %c0_i32_0 : i32, i32
  }
  func.func @transform_3(%arg0: i32) -> (i32, i32) {
    %c0_i32 = arith.constant 0 : i32
    %c0_i32_0 = arith.constant 0 : i32
    %c0_i32_1 = arith.constant 0 : i32
    return %c0_i32, %c0_i32_0 : i32, i32
  }
  func.func @transform_4(%arg0: i32) -> (i32, i32) {
    %c0_i32 = arith.constant 0 : i32
    %c0_i32_0 = arith.constant 0 : i32
    return %arg0, %c0_i32 : i32, i32
  }
}

</mosaic_0001>

<llo_original>
// kernel: tpu_custom_call.1
$region0: #{tpu_custom_call.1}
  #allocation0 [shape = 'u32[]', space=smem, size = 0x4, offset = 0x4, fixed_abs, tag = 'smem constant byte address 0x4 - core index']
  #allocation1 [shape = 'u32[144,128]{1,0:T(1,128)}', space=vmem, size = 0x12000, scoped, tag = 'internal scratch']
  %s0 = inlined_call_operand.hbm [shape: f32[98,128], index: 0, kind: input, shape index: {}]
  %s1 = inlined_call_operand.hbm [shape: f32[98,128], index: 1, kind: input, shape index: {}]
  %s2 = inlined_call_operand.vmem [shape: f32[1,128], index: 2, kind: input, shape index: {}]
  %s3 = inlined_call_operand.vmem [shape: f32[1,128], index: 3, kind: input, shape index: {}]
  %s4 = inlined_call_operand.hbm [shape: f32[98,128], index: 4, kind: output, shape index: {}]
  %s5 = sld [smem:[#allocation0]]
  $region57: #{tpu_custom_call.1} parent=0
    _
  %s7 = ssub.s32 1, %s5
  %s8 = scalar_select 0, %s7, %s5
  $region1: #{tpu_custom_call.1} parent=0
    #allocation2 [shape = 'u8[32768]{0}', space=vmem, size = 0x8000, scoped, tag = 'input window, operand 0']
    #allocation3 [shape = 's32[2]{0}', space=sflag, size = 0x8, scoped, tag = 'scoped memory for tpu_custom_call.1']
    #allocation4 [shape = 's32[2]{0}', space=sflag, size = 0x8, scoped, tag = 'scoped memory for tpu_custom_call.1']
    #allocation5 [shape = 'u8[32768]{0}', space=vmem, size = 0x8000, scoped, tag = 'input window, operand 1']
    #allocation6 [shape = 's32[2]{0}', space=sflag, size = 0x8, scoped, tag = 'scoped memory for tpu_custom_call.1']
    #allocation7 [shape = 'u8[32768]{0}', space=vmem, size = 0x8000, scoped, tag = 'output window, operand 0']
    %9 = vsyncpa [#allocation3], 0
    %s10 = scalar_lea.sflag [#allocation3], 1
    %11 = vsyncpa %s10, 0
    %12 = vsyncpa [#allocation6], 0
    %s13 = scalar_lea.sflag [#allocation6], 1
    %14 = vsyncpa %s13, 0
    %15 = vsyncpa [#allocation4], 0
    %s16 = scalar_lea.sflag [#allocation4], 1
    %17 = vsyncpa %s16, 0
    loop: start=0, step=1, limit=6
    $region2: #{tpu_custom_call.1} parent=1 // loop_pre_header
      _
    $region3: #{tpu_custom_call.1} parent=1 // loop_header
      %s19 = sphi 0, %s23
      %p20 = scmp.ge.s32.totalorder %s19, 6
      %s29 = sphi 0, %s31
      %s32 = sphi 0, %s29
      %s33 = sphi 0, %s32
      %s49 = sphi 0, %s33
      %s55 = sphi 0, %s57
      %s58 = sphi 0, %s55
      %s59 = sphi 0, %s58
      %s75 = sphi 0, %s59
      %s79 = sphi 0, %s79
      %s81 = sphi 0, %s79
      %s82 = sphi 0, %s81
      %s96 = sphi 0, %s82
      %s100 = sphi 0, %s100
      %s102 = sphi 0, %s100
      %s103 = sphi 0, %s102
      %s117 = sphi 0, %s103
      %s123 = sphi 0, %s125
      %s126 = sphi 0, %s123
      %s127 = sphi 0, %s126
      %s143 = sphi 0, %s127
    $region4: #{tpu_custom_call.1} parent=1 // loop_header_branch
      %22 = sbr.rel (%p20) target = $region8
    $region5: #{tpu_custom_call.1} parent=1 // loop_body
      %s24 = ssub.s32 %s19, 1
      %s25 = ssub.s32 %s19, 2
      %s26 = sadd.s32 %s19, 1
      %s27 = ssub.s32 %s19, %s26
      %p28 = scmp.eq.s32.totalorder %s27, 0
      %s30 = sadd.s32 %s29, 1
      %s31 = scalar_select %p28, %s29, %s30
      %p34 = pneg %p28
      %p35 = scmp.eq.s32.totalorder %s19, 3
      %p36 = por %p34, %p35
      %p37 = scmp.ne.s32.totalorder %s29, %s32
      %p38 = scmp.eq.s32.totalorder %s19, 0
      %p39 = por %p37, %p38
      %p40 = scmp.ne.s32.totalorder %s29, %s32
      %p41 = scmp.eq.s32.totalorder %s24, 3
      %p42 = por %p40, %p41
      %p43 = scmp.ne.s32.totalorder %s32, %s33
      %p44 = scmp.eq.s32.totalorder %s24, 0
      %p45 = por %p43, %p44
      %p46 = scmp.ne.s32.totalorder %s32, %s33
      %p47 = scmp.eq.s32.totalorder %s25, 3
      %p48 = por %p46, %p47
      %p50 = scmp.ne.s32.totalorder %s33, %s49
      %p51 = scmp.eq.s32.totalorder %s25, 0
      %p52 = por %p50, %p51
      %s53 = ssub.s32 %s19, %s26
      %p54 = scmp.eq.s32.totalorder %s53, 0
      %s56 = sadd.s32 %s55, 1
      %s57 = scalar_select %p54, %s55, %s56
      %p60 = pneg %p54
      %p61 = scmp.eq.s32.totalorder %s19, 3
      %p62 = por %p60, %p61
      %p63 = scmp.ne.s32.totalorder %s55, %s58
      %p64 = scmp.eq.s32.totalorder %s19, 0
      %p65 = por %p63, %p64
      %p66 = scmp.ne.s32.totalorder %s55, %s58
      %p67 = scmp.eq.s32.totalorder %s24, 3
      %p68 = por %p66, %p67
      %p69 = scmp.ne.s32.totalorder %s58, %s59
      %p70 = scmp.eq.s32.totalorder %s24, 0
      %p71 = por %p69, %p70
      %p72 = scmp.ne.s32.totalorder %s58, %s59
      %p73 = scmp.eq.s32.totalorder %s25, 3
      %p74 = por %p72, %p73
      %p76 = scmp.ne.s32.totalorder %s59, %s75
      %p77 = scmp.eq.s32.totalorder %s25, 0
      %p78 = por %p76, %p77
      %s80 = sadd.s32 %s79, 1
      %p83 = scmp.eq.s32.totalorder %s19, 3
      %p84 = scmp.ne.s32.totalorder %s79, %s81
      %p85 = scmp.eq.s32.totalorder %s19, 0
      %p86 = por %p84, %p85
      %p87 = scmp.ne.s32.totalorder %s79, %s81
      %p88 = scmp.eq.s32.totalorder %s24, 3
      %p89 = por %p87, %p88
      %p90 = scmp.ne.s32.totalorder %s81, %s82
      %p91 = scmp.eq.s32.totalorder %s24, 0
      %p92 = por %p90, %p91
      %p93 = scmp.ne.s32.totalorder %s81, %s82
      %p94 = scmp.eq.s32.totalorder %s25, 3
      %p95 = por %p93, %p94
      %p97 = scmp.ne.s32.totalorder %s82, %s96
      %p98 = scmp.eq.s32.totalorder %s25, 0
      %p99 = por %p97, %p98
      %s101 = sadd.s32 %s100, 1
      %p104 = scmp.eq.s32.totalorder %s19, 3
      %p105 = scmp.ne.s32.totalorder %s100, %s102
      %p106 = scmp.eq.s32.totalorder %s19, 0
      %p107 = por %p105, %p106
      %p108 = scmp.ne.s32.totalorder %s100, %s102
      %p109 = scmp.eq.s32.totalorder %s24, 3
      %p110 = por %p108, %p109
      %p111 = scmp.ne.s32.totalorder %s102, %s103
      %p112 = scmp.eq.s32.totalorder %s24, 0
      %p113 = por %p111, %p112
      %p114 = scmp.ne.s32.totalorder %s102, %s103
      %p115 = scmp.eq.s32.totalorder %s25, 3
      %p116 = por %p114, %p115
      %p118 = scmp.ne.s32.totalorder %s103, %s117
      %p119 = scmp.eq.s32.totalorder %s25, 0
      %p120 = por %p118, %p119
      %s121 = ssub.s32 %s19, %s26
      %p122 = scmp.eq.s32.totalorder %s121, 0
      %s124 = sadd.s32 %s123, 1
      %s125 = scalar_select %p122, %s123, %s124
      %p128 = pneg %p122
      %p129 = scmp.eq.s32.totalorder %s19, 3
      %p130 = por %p128, %p129
      %p131 = scmp.ne.s32.totalorder %s123, %s126
      %p132 = scmp.eq.s32.totalorder %s19, 0
      %p133 = por %p131, %p132
      %p134 = scmp.ne.s32.totalorder %s123, %s126
      %p135 = scmp.eq.s32.totalorder %s24, 3
      %p136 = por %p134, %p135
      %p137 = scmp.ne.s32.totalorder %s126, %s127
      %p138 = scmp.eq.s32.totalorder %s24, 0
      %p139 = por %p137, %p138
      %p140 = scmp.ne.s32.totalorder %s126, %s127
      %p141 = scmp.eq.s32.totalorder %s25, 3
      %p142 = por %p140, %p141
      %p144 = scmp.ne.s32.totalorder %s127, %s143
      %p145 = scmp.eq.s32.totalorder %s25, 0
      %p146 = por %p144, %p145
      %p147 = scmp.le.s32.totalorder 1, %s19
      %p148 = scmp.lt.s32.totalorder %s19, 5
      %p149 = pnand %p147, %p148
      %p150 = pneg %p149
      // Predicated region
      $region9: #{tpu_custom_call.1} parent=5 // pred_check
        _
      $region10: #{tpu_custom_call.1} parent=5 // pred_check_branch
        %152 = sbr.rel (%p149) target = $region12
      $region11: #{tpu_custom_call.1} parent=5 // pred_region
        %s153 = ssub.s32 %s19, 1
        // Predicated region
        $region13: #{tpu_custom_call.1} parent=11 // pred_check
          %p154 = pneg %p92
        $region14: #{tpu_custom_call.1} parent=11 // pred_check_branch
          %156 = sbr.rel (%p154) target = $region16
        $region15: #{tpu_custom_call.1} parent=11 // pred_region
          _
        $region16: #{tpu_custom_call.1} parent=11 // pred_fallthru
          _
        // Predicated region
        $region17: #{tpu_custom_call.1} parent=11 // pred_check
          %p157 = pneg %p113
        $region18: #{tpu_custom_call.1} parent=11 // pred_check_branch
          %159 = sbr.rel (%p157) target = $region20
        $region19: #{tpu_custom_call.1} parent=11 // pred_region
          _
        $region20: #{tpu_custom_call.1} parent=11 // pred_fallthru
          _
      $region12: #{tpu_custom_call.1} parent=5 // pred_fallthru
        _
      %p160 = scmp.lt.s32.totalorder %s19, 4
      // Predicated region
      $region21: #{tpu_custom_call.1} parent=5 // pred_check
        %p161 = pneg %p160
      $region22: #{tpu_custom_call.1} parent=5 // pred_check_branch
        %163 = sbr.rel (%p161) target = $region24
      $region23: #{tpu_custom_call.1} parent=5 // pred_region
        // Predicated region
        $region25: #{tpu_custom_call.1} parent=23 // pred_check
          %p164 = pneg %p39
        $region26: #{tpu_custom_call.1} parent=23 // pred_check_branch
          %166 = sbr.rel (%p164) target = $region28
        $region27: #{tpu_custom_call.1} parent=23 // pred_region
          %s167 = sand.u32 %s29, 1
          %s168 = scalar_lea.sflag [#allocation3], %s167
          %s169 = sand.u32 %s29, 1
          %s170 = smul.addr %s169, 32
          %s171 = scalar_lea.vmem [#allocation2], %s170
          %s172 = smul.u32 4, %s19
          %s173 = ssub.s32 13, %s172
          %p174 = scmp.lt.s32.totalorder %s173, 4
          %s175 = scalar_select %p174, %s173, 4
          %s176 = smul.u32 128, %s175
          %s178 = ssub.s32 512, %s176
          %179 = vsyncadd %s168, %s178
          %p180 = scmp.ne.s32.totalorder 0, %s176
          %s181 = smul.addr %s172, 128
          %s182 = scalar_lea.hbm %s0, %s181
          %s183 = smul.u32 8, %s175
          %s184 = sshll.u32 %s171, 4
          %s185 = int_to_ptr.vmem [resolvable:$true] %s184
          %s186 = sshll.u32 %s183, 4
          %190 = dma.hbm_to_vmem [thread:$0]  (%p180), %s182, %s186, %s185, %s168, 128, 128, 8
        $region28: #{tpu_custom_call.1} parent=23 // pred_fallthru
          _
        // Predicated region
        $region29: #{tpu_custom_call.1} parent=23 // pred_check
          %p191 = pneg %p65
        $region30: #{tpu_custom_call.1} parent=23 // pred_check_branch
          %193 = sbr.rel (%p191) target = $region32
        $region31: #{tpu_custom_call.1} parent=23 // pred_region
          %s194 = sand.u32 %s55, 1
          %s195 = scalar_lea.sflag [#allocation6], %s194
          %s196 = sand.u32 %s55, 1
          %s197 = smul.addr %s196, 32
          %s198 = scalar_lea.vmem [#allocation5], %s197
          %s199 = smul.u32 4, %s19
          %s200 = ssub.s32 13, %s199
          %p201 = scmp.lt.s32.totalorder %s200, 4
          %s202 = scalar_select %p201, %s200, 4
          %s203 = smul.u32 128, %s202
          %s205 = ssub.s32 512, %s203
          %206 = vsyncadd %s195, %s205
          %p207 = scmp.ne.s32.totalorder 0, %s203
          %s208 = smul.addr %s199, 128
          %s209 = scalar_lea.hbm %s1, %s208
          %s210 = smul.u32 8, %s202
          %s211 = sshll.u32 %s198, 4
          %s212 = int_to_ptr.vmem [resolvable:$true] %s211
          %s213 = sshll.u32 %s210, 4
          %217 = dma.hbm_to_vmem [thread:$0]  (%p207), %s209, %s213, %s212, %s195, 128, 128, 8
        $region32: #{tpu_custom_call.1} parent=23 // pred_fallthru
          _
      $region24: #{tpu_custom_call.1} parent=5 // pred_fallthru
        _
      %p218 = scmp.le.s32.totalorder 1, %s19
      %p219 = scmp.lt.s32.totalorder %s19, 5
      %p220 = pnand %p218, %p219
      %p221 = pneg %p220
      // Predicated region
      $region33: #{tpu_custom_call.1} parent=5 // pred_check
        _
      $region34: #{tpu_custom_call.1} parent=5 // pred_check_branch
        %223 = sbr.rel (%p220) target = $region36
      $region35: #{tpu_custom_call.1} parent=5 // pred_region
        %s224 = ssub.s32 %s19, 1
        %s225 = sand.u32 %s32, 1
        %s226 = scalar_lea.sflag [#allocation3], %s225
        %s227 = sand.u32 %s32, 1
        %s228 = smul.addr %s227, 32
        %s229 = scalar_lea.vmem [#allocation2], %s228
        // Predicated region
        $region37: #{tpu_custom_call.1} parent=35 // pred_check
          %p230 = pneg %p45
        $region38: #{tpu_custom_call.1} parent=35 // pred_check_branch
          %232 = sbr.rel (%p230) target = $region40
        $region39: #{tpu_custom_call.1} parent=35 // pred_region
          %233 = dma.done %s226, 512
        $region40: #{tpu_custom_call.1} parent=35 // pred_fallthru
          _
        %s234 = sand.u32 %s58, 1
        %s235 = scalar_lea.sflag [#allocation6], %s234
        %s236 = sand.u32 %s58, 1
        %s237 = smul.addr %s236, 32
        %s238 = scalar_lea.vmem [#allocation5], %s237
        // Predicated region
        $region41: #{tpu_custom_call.1} parent=35 // pred_check
          %p239 = pneg %p71
        $region42: #{tpu_custom_call.1} parent=35 // pred_check_branch
          %241 = sbr.rel (%p239) target = $region44
        $region43: #{tpu_custom_call.1} parent=35 // pred_region
          %242 = dma.done %s235, 512
        $region44: #{tpu_custom_call.1} parent=35 // pred_fallthru
          _
        %s243 = sand.u32 %s32, 1
        %s244 = scalar_lea.sflag [#allocation3], %s243
        %s245 = sand.u32 %s32, 1
        %s246 = smul.addr %s245, 32
        %s247 = scalar_lea.vmem [#allocation2], %s246
        %p248 = pneg %p45
        %p249 = pneg %p42
        %s250 = sand.u32 %s58, 1
        %s251 = scalar_lea.sflag [#allocation6], %s250
        %s252 = sand.u32 %s58, 1
        %s253 = smul.addr %s252, 32
        %s254 = scalar_lea.vmem [#allocation5], %s253
        %p255 = pneg %p71
        %p256 = pneg %p68
        %p257 = pneg %p92
        %p258 = pneg %p89
        %p259 = pneg %p113
        %p260 = pneg %p110
        %p261 = pneg %p139
        %p262 = pneg %p136
        %s263 = sand.u32 %s126, 1
        %s264 = scalar_lea.sflag [#allocation4], %s263
        %s265 = sand.u32 %s126, 1
        %s266 = smul.addr %s265, 32
        %s267 = scalar_lea.vmem [#allocation7], %s266
        %s268 = smul.u32 4, %s24
        %s269 = ssub.s32 13, %s268
        %p270 = scmp.lt.s32.totalorder %s269, 4
        %s271 = scalar_select %p270, %s269, 4
        %s272 = smul.u32 128, %s271
        %s273 = smul.u32 4, %s24
        %s274 = ssub.s32 13, %s273
        %p275 = scmp.lt.s32.totalorder %s274, 4
        %s276 = scalar_select %p275, %s274, 4
        %s277 = smul.u32 128, %s276
        %s278 = smul.u32 4, %s24
        %s279 = ssub.s32 13, %s278
        %p280 = scmp.lt.s32.totalorder %s279, 4
        %s281 = scalar_select %p280, %s279, 4
        %s282 = smul.u32 128, %s281
        %v283 = vld [vmem:[%s229] sm:$0xff]
        %v284 = vld [vmem:[%s229 + $0x8] sm:$0xff]
        %v285 = vld [vmem:[%s229 + $0x10] sm:$0xff]
        %v286 = vld [vmem:[%s229 + $0x18] sm:$0xff]
        %v287 = vld [vmem:[%s238] sm:$0xff]
        %v288 = vld [vmem:[%s238 + $0x8] sm:$0xff]
        %v289 = vld [vmem:[%s238 + $0x10] sm:$0xff]
        %v290 = vld [vmem:[%s238 + $0x18] sm:$0xff]
        %v291 = vld [vmem:[%s2] sm:$0x1]
        %v293 = vlaneseq
        %v294 = vshrl.u32 %v293, 7
        %v295 = vsub.s32 0, %v294
        %v296 = vrot.slane %v291, %v295
        %v298 = vmul.f32 %v283, %v296
        %v299 = vmul.f32 %v284, %v296
        %v300 = vmul.f32 %v285, %v296
        %v301 = vmul.f32 %v286, %v296
        %v302 = vld [vmem:[%s3] sm:$0x1]
        %v304 = vlaneseq
        %v305 = vshrl.u32 %v304, 7
        %v306 = vsub.s32 0, %v305
        %v307 = vrot.slane %v302, %v306
        %v309 = vadd.f32 %v298, %v307
        %v310 = vadd.f32 %v299, %v307
        %v311 = vadd.f32 %v300, %v307
        %v312 = vadd.f32 %v301, %v307
        %v313 = vadd.f32 %v309, %v287
        %v314 = vadd.f32 %v310, %v288
        %v315 = vadd.f32 %v311, %v289
        %v316 = vadd.f32 %v312, %v290
        %v317 = vmax.f32 %v313, -1.0
        %v318 = vmax.f32 %v314, -1.0
        %v319 = vmax.f32 %v315, -1.0
        %v320 = vmax.f32 %v316, -1.0
        %v321 = vmin.f32 %v317, 1.0
        %v322 = vmin.f32 %v318, 1.0
        %v323 = vmin.f32 %v319, 1.0
        %v324 = vmin.f32 %v320, 1.0
        %325 = vst [vmem:[%s267] sm:$0xff] %v321
        %326 = vst [vmem:[%s267 + $0x8] sm:$0xff] %v322
        %327 = vst [vmem:[%s267 + $0x10] sm:$0xff] %v323
        %328 = vst [vmem:[%s267 + $0x18] sm:$0xff] %v324
        %s329 = sand.u32 %s126, 1
        %s330 = scalar_lea.sflag [#allocation4], %s329
        %s331 = sand.u32 %s126, 1
        %s332 = smul.addr %s331, 32
        %s333 = scalar_lea.vmem [#allocation7], %s332
        // Predicated region
        $region45: #{tpu_custom_call.1} parent=35 // pred_check
          %p334 = pneg %p136
        $region46: #{tpu_custom_call.1} parent=35 // pred_check_branch
          %336 = sbr.rel (%p334) target = $region48
        $region47: #{tpu_custom_call.1} parent=35 // pred_region
          %s337 = smul.u32 4, %s24
          %s338 = ssub.s32 13, %s337
          %p339 = scmp.lt.s32.totalorder %s338, 4
          %s340 = scalar_select %p339, %s338, 4
          %s341 = smul.u32 128, %s340
          %s343 = ssub.s32 512, %s341
          %344 = vsyncadd %s330, %s343
          %p345 = scmp.ne.s32.totalorder 0, %s341
          %s346 = smul.addr %s337, 128
          %s347 = scalar_lea.hbm %s4, %s346
          %s348 = smul.u32 8, %s340
          %s349 = sshll.u32 %s333, 4
          %s350 = int_to_ptr.vmem [resolvable:$true] %s349
          %s351 = sshll.u32 %s348, 4
          %355 = dma.vmem_to_hbm [thread:$0]  (%p345), %s350, %s351, %s347, %s330, 128, 128, 8
        $region48: #{tpu_custom_call.1} parent=35 // pred_fallthru
          _
      $region36: #{tpu_custom_call.1} parent=5 // pred_fallthru
        _
      %p356 = scmp.le.s32.totalorder 2, %s19
      // Predicated region
      $region49: #{tpu_custom_call.1} parent=5 // pred_check
        %p357 = pneg %p356
      $region50: #{tpu_custom_call.1} parent=5 // pred_check_branch
        %359 = sbr.rel (%p357) target = $region52
      $region51: #{tpu_custom_call.1} parent=5 // pred_region
        %s360 = ssub.s32 %s19, 2
        // Predicated region
        $region53: #{tpu_custom_call.1} parent=51 // pred_check
          %p361 = pneg %p142
        $region54: #{tpu_custom_call.1} parent=51 // pred_check_branch
          %363 = sbr.rel (%p361) target = $region56
        $region55: #{tpu_custom_call.1} parent=51 // pred_region
          %s364 = sand.u32 %s127, 1
          %s365 = scalar_lea.sflag [#allocation4], %s364
          %s366 = sand.u32 %s127, 1
          %s367 = smul.addr %s366, 32
          %s368 = scalar_lea.vmem [#allocation7], %s367
          %369 = dma.done %s365, 512
        $region56: #{tpu_custom_call.1} parent=51 // pred_fallthru
          _
      $region52: #{tpu_custom_call.1} parent=5 // pred_fallthru
        _
    $region6: #{tpu_custom_call.1} parent=1 // loop_footer
      %s23 = sadd.s32 1, %s19
    $region7: #{tpu_custom_call.1} parent=1 // loop_footer_branch
      %18 = sbr.rel target = $region3
    $region8: #{tpu_custom_call.1} parent=1 // loop_exit
      _
    %370 = vsyncpa [#allocation3], 1
    %s371 = scalar_lea.sflag [#allocation3], 1
    %372 = vsyncpa %s371, 1
    %373 = vsyncpa [#allocation6], 1
    %s374 = scalar_lea.sflag [#allocation6], 1
    %375 = vsyncpa %s374, 1
    %376 = vsyncpa [#allocation4], 1
    %s377 = scalar_lea.sflag [#allocation4], 1
    %378 = vsyncpa %s377, 1

</llo_original>
